<compile_context>
chip_gen: v7x
topology: tpu7x:2x2x1
jax: 0.10.0
libtpu: 0.0.40
codegen_flags: <defaults>
</compile_context>

<pallas_src>
import math

import jax
import jax.numpy as jnp
from jax.experimental import pallas as pl
from jax.experimental.pallas import tpu as pltpu

EPS = 1e-6


# ---------------------------------------------------------------------------
# Generation-aware VMEM sizing
# ---------------------------------------------------------------------------
def _vmem_capacity_bytes():
    try:
        return int(pltpu.get_tpu_info().vmem_capacity_bytes)
    except Exception:
        return 64 * 1024 * 1024  # conservative (v7x physical)


_VMEM_CAP = _vmem_capacity_bytes()
# Scoped limit ~75% of physical (≈96 MiB on v5e/v6e, ≈48 MiB on v7x),
# leaving headroom for Mosaic internal scratch / semaphores.
VMEM_LIMIT_BYTES = max(32 * 1024 * 1024,
                       min(int(0.75 * _VMEM_CAP), 100 * 1024 * 1024))
# Working-set budget used to auto-size row tiles.
TILE_VMEM_BUDGET_BYTES = VMEM_LIMIT_BYTES // 2


def _compiler_params(dims):
    return pltpu.CompilerParams(dimension_semantics=dims,
                                vmem_limit_bytes=VMEM_LIMIT_BYTES)


def _choose_row_tile(rows, per_row_bytes, resident_bytes, cap=1024):
    """Largest row tile (multiple of 8, capped) fitting the VMEM tile budget.
    `per_row_bytes` should already include the 2x double-buffer factor for
    *streamed* row tiles only; `resident_bytes` (constant-index weights) is
    counted once (they are revisited, not re-DMA'd)."""
    avail = TILE_VMEM_BUDGET_BYTES - resident_bytes
    avail = max(avail, 8 * per_row_bytes)
    tile = avail // per_row_bytes
    tile = int(min(tile, cap, rows))
    if tile >= rows:
        return rows          # single step, block == full array (no alignment issue)
    return max(8, (tile // 8) * 8)


def _maybe_pad_rows(a, rows_p):
    if a.shape[0] == rows_p:
        return a
    pad = [(0, rows_p - a.shape[0])] + [(0, 0)] * (a.ndim - 1)
    return jnp.pad(a, pad)


def _layernorm_rows(x, alpha, beta):
    """LN over the last axis of a (tile_rows, n) f32 block.
    Matches the torch module: unbiased std (ddof=1), eps added to the std,
    scalar alpha/beta. Two-pass centered variance; reciprocal on the EUP."""
    n = x.shape[-1]
    mean = jnp.sum(x, axis=-1, keepdims=True) * (1.0 / n)
    d = x - mean
    var = jnp.sum(d * d, axis=-1, keepdims=True) * (1.0 / (n - 1))
    inv = pl.reciprocal(jnp.sqrt(var) + EPS, approx=True)
    return d * (alpha * inv) + beta


# ---------------------------------------------------------------------------
# Kernel 1: fused LayerNorm1 + QKV projection (bf16 MXU, f32 accumulate)
# ---------------------------------------------------------------------------
def _ln_qkv_kernel(alpha_ref, beta_ref, x_ref, w_ref, b_ref, o_ref):
    x = x_ref[...]                                         # f32 (tile, D)
    xn = _layernorm_rows(x, alpha_ref[0], beta_ref[0])
    y = jnp.dot(xn.astype(jnp.bfloat16), w_ref[...],      # bf16 x bf16
                preferred_element_type=jnp.float32)
    o_ref[...] = (y + b_ref[...]).astype(o_ref.dtype)


def ln_qkv(x2, ln_a, ln_b, wqkv, bqkv):
    rows, d_in = x2.shape
    d_out = wqkv.shape[1]                                  # 3*D
    per_row = (2 * 4 * d_in          # streamed x tile (f32, double-buffered)
               + 2 * 2 * d_out       # streamed out tile (bf16, double-buffered)
               + 2 * d_in            # xn (bf16, local)
               + 4 * d_out)          # y (f32, local)
    resident = wqkv.size * 2 + bqkv.size * 4
    tile = _choose_row_tile(rows, per_row, resident)
    rows_p = pl.cdiv(rows, tile) * tile
    out = pl.pallas_call(
        _ln_qkv_kernel,
        out_shape=jax.ShapeDtypeStruct((rows_p, d_out), jnp.bfloat16),
        grid=(rows_p // tile,),
        in_specs=[
            pl.BlockSpec(memory_space=pltpu.SMEM),           # LN alpha (1,)
            pl.BlockSpec(memory_space=pltpu.SMEM),           # LN bias  (1,)
            pl.BlockSpec((tile, d_in), lambda i: (i, 0)),    # x rows (f32)
            pl.BlockSpec((d_in, d_out), lambda i: (0, 0)),   # W_qkv (bf16, resident)
            pl.BlockSpec((1, d_out), lambda i: (0, 0)),      # b_qkv (f32)
        ],
        out_specs=pl.BlockSpec((tile, d_out), lambda i: (i, 0)),
        compiler_params=_compiler_params(("parallel",)),
    )(ln_a, ln_b, _maybe_pad_rows(x2, rows_p), wqkv, bqkv)
    return out if rows_p == rows else out[:rows]


# ---------------------------------------------------------------------------
# Kernel 2: multi-head attention core.
# One batch element per grid step; head split/merge done in VMEM; output is
# written lane-dense as (S, D). The 1/sqrt(dk) scale is pre-folded into W_q.
# ---------------------------------------------------------------------------
def mha_attention(qkv3, bias3, H):
    B, S, threeD = qkv3.shape
    D = threeD // 3
    dk = D // H

    def _mha_kernel(qkv_ref, bias_ref, o_ref):
        qkv = qkv_ref[...]                                   # bf16 (S, 3D)
        q = qkv[:, :D].reshape(S, H, dk)                     # (S, H, dk)
        k = qkv[:, D:2 * D].reshape(S, H, dk)
        v = qkv[:, 2 * D:].reshape(S, H, dk)
        # (H, Sq, Sk) f32 scores from bf16 operands (scale already in W_q).
        scores = jnp.einsum("qhd,khd->hqk", q, k,
                            preferred_element_type=jnp.float32)
        scores = scores + bias_ref[...][None, :, :]          # additive mask bias
        m = jnp.max(scores, axis=-1, keepdims=True)
        p = jnp.exp(scores - m)
        denom = jnp.sum(p, axis=-1, keepdims=True)
        p = p * pl.reciprocal(denom, approx=True)
        ctx = jnp.einsum("hqk,khd->qhd", p.astype(jnp.bfloat16), v,
                         preferred_element_type=jnp.float32)  # (S, H, dk)
        o_ref[...] = ctx.reshape(S, D).astype(o_ref.dtype)    # lane-dense (S, D)

    # TODO(synk): flash-style KV tiling + (B, H, q-tile) grid for large S / v7x.
    return pl.pallas_call(
        _mha_kernel,
        out_shape=jax.ShapeDtypeStruct((B, S, D), jnp.bfloat16),
        grid=(B,),
        in_specs=[
            pl.BlockSpec((None, S, threeD), lambda b: (b, 0, 0)),  # qkv (bf16)
            pl.BlockSpec((None, S, S), lambda b: (b, 0, 0)),       # additive bias (f32)
        ],
        out_specs=pl.BlockSpec((None, S, D), lambda b: (b, 0, 0)),
        compiler_params=_compiler_params(("parallel",)),
    )(qkv3, bias3)


# ---------------------------------------------------------------------------
# Kernel 3: fused  W_O + residual  ->  LN2 + FFN(W1, relu, W2) + residual
# (y1 and the dff-wide intermediate never touch HBM)
# ---------------------------------------------------------------------------
def _attn_out_ffn_kernel(ln2a_ref, ln2b_ref, ctx_ref, x_ref, wo_ref, bo_ref,
                         w1_ref, b1_ref, w2_ref, b2_ref, o_ref):
    y1 = jnp.dot(ctx_ref[...], wo_ref[...],                # bf16 x bf16
                 preferred_element_type=jnp.float32)
    y1 = y1 + bo_ref[...] + x_ref[...]                     # f32 residual 0
    xn = _layernorm_rows(y1, ln2a_ref[0], ln2b_ref[0])
    h = jnp.dot(xn.astype(jnp.bfloat16), w1_ref[...],
                preferred_element_type=jnp.float32)
    h = jnp.maximum(h + b1_ref[...], 0.0)
    y2 = jnp.dot(h.astype(jnp.bfloat16), w2_ref[...],
                 preferred_element_type=jnp.float32)
    o_ref[...] = (y2 + b2_ref[...] + y1).astype(o_ref.dtype)   # residual 1


def attn_out_ffn(ctx2, x2, ln_a, ln_b, wo, bo, w1, b1, w2, b2):
    rows, d = x2.shape
    dff = w1.shape[1]
    per_row = (2 * 2 * d            # ctx tile (bf16, double-buffered)
               + 2 * 4 * d          # x tile (f32, double-buffered)
               + 2 * 4 * d          # out tile (f32, double-buffered)
               + 4 * d + 2 * d      # y1 (f32) + xn (bf16) locals
               + 4 * dff + 2 * dff)  # h (f32) + h (bf16) locals
    resident = (wo.size + w1.size + w2.size) * 2 + (bo.size + b1.size + b2.size) * 4
    # TODO(synk): K-tile / stream W1,W2 when resident weights approach VMEM (v7x).
    tile = _choose_row_tile(rows, per_row, resident)
    rows_p = pl.cdiv(rows, tile) * tile
    out = pl.pallas_call(
        _attn_out_ffn_kernel,
        out_shape=jax.ShapeDtypeStruct((rows_p, d), jnp.float32),
        grid=(rows_p // tile,),
        in_specs=[
            pl.BlockSpec(memory_space=pltpu.SMEM),           # LN2 alpha
            pl.BlockSpec(memory_space=pltpu.SMEM),           # LN2 bias
            pl.BlockSpec((tile, d), lambda i: (i, 0)),       # attention context (bf16)
            pl.BlockSpec((tile, d), lambda i: (i, 0)),       # residual x (f32)
            pl.BlockSpec((d, d), lambda i: (0, 0)),          # W_O (bf16)
            pl.BlockSpec((1, d), lambda i: (0, 0)),          # b_O
            pl.BlockSpec((d, dff), lambda i: (0, 0)),        # W1 (bf16)
            pl.BlockSpec((1, dff), lambda i: (0, 0)),        # b1
            pl.BlockSpec((dff, d), lambda i: (0, 0)),        # W2 (bf16)
            pl.BlockSpec((1, d), lambda i: (0, 0)),          # b2
        ],
        out_specs=pl.BlockSpec((tile, d), lambda i: (i, 0)),
        compiler_params=_compiler_params(("parallel",)),
    )(ln_a, ln_b, _maybe_pad_rows(ctx2, rows_p), _maybe_pad_rows(x2, rows_p),
      wo, bo, w1, b1, w2, b2)
    return out if rows_p == rows else out[:rows]


# ---------------------------------------------------------------------------
# Parameter prep (done once) + EncoderBlock forward
# ---------------------------------------------------------------------------
def prepare_params(p):
    """Concat QKV weights once, fold 1/sqrt(dk) into W_q/b_q, cast weights to
    bf16, reshape biases for in-kernel broadcast."""
    d_model = p["wq"].shape[0]
    dk = d_model // p["h"]
    scale = 1.0 / math.sqrt(dk)
    wqkv = jnp.concatenate([p["wq"] * scale, p["wk"], p["wv"]], axis=1)
    bqkv = jnp.concatenate([p["bq"] * scale, p["bk"], p["bv"]], axis=0)
    return dict(
        h=p["h"],
        wqkv=wqkv.astype(jnp.bfloat16),
        bqkv=bqkv.reshape(1, -1).astype(jnp.float32),
        wo=p["wo"].astype(jnp.bfloat16), bo=p["bo"].reshape(1, -1),
        w1=p["w1"].astype(jnp.bfloat16), b1=p["b1"].reshape(1, -1),
        w2=p["w2"].astype(jnp.bfloat16), b2=p["b2"].reshape(1, -1),
        ln1_a=p["ln1_a"], ln1_b=p["ln1_b"],
        ln2_a=p["ln2_a"], ln2_b=p["ln2_b"],
    )


def encoder_block(x, src_mask, params):
    B, S, D = x.shape
    H = params["h"]
    assert D % H == 0 and D >= 2, "d_model must be divisible by h and >= 2"
    rows = B * S
    x2 = x.reshape(rows, D)

    # residual connection 0:  x + W_O( MHA( LN1(x) ) )
    qkv = ln_qkv(x2, params["ln1_a"], params["ln1_b"],
                 params["wqkv"], params["bqkv"])            # (rows, 3D) bf16
    qkv3 = qkv.reshape(B, S, 3 * D)                         # free view

    # Additive attention bias: (mask == 0) -> -1e9, else 0 (f32, per batch).
    # TODO(synk): for key-padding masks, pass per-batch key lengths via SMEM
    # and build the bias in-kernel with broadcasted_iota (saves the B*S^2 read).
    mask3 = jnp.broadcast_to(src_mask, (B, 1, S, S))[:, 0]
    bias3 = jnp.where(mask3 == 0, jnp.float32(-1e9), jnp.float32(0.0))

    ctx3 = mha_attention(qkv3, bias3, H)                    # (B, S, D) bf16
    ctx2 = ctx3.reshape(rows, D)                            # free view

    # W_O + residual  ->  LN2 + FFN + residual, fully fused:
    y2 = attn_out_ffn(ctx2, x2, params["ln2_a"], params["ln2_b"],
                      params["wo"], params["bo"],
                      params["w1"], params["b1"], params["w2"], params["b2"])
    return y2.reshape(B, S, D)


# ---------------------------------------------------------------------------
# Parameter init + pure-JAX reference
# ---------------------------------------------------------------------------
def init_params(key, d_model, h, dff):
    ks = jax.random.split(key, 8)

    def lin(k, din, dout):
        return jax.random.normal(k, (din, dout), jnp.float32) * (1.0 / math.sqrt(din))

    return dict(
        h=h,
        wq=lin(ks[0], d_model, d_model), bq=jnp.zeros((d_model,), jnp.float32),
        wk=lin(ks[1], d_model, d_model), bk=jnp.zeros((d_model,), jnp.float32),
        wv=lin(ks[2], d_model, d_model), bv=jnp.zeros((d_model,), jnp.float32),
        wo=lin(ks[3], d_model, d_model), bo=jnp.zeros((d_model,), jnp.float32),
        w1=lin(ks[4], d_model, dff),
        b1=0.01 * jax.random.normal(ks[5], (dff,), jnp.float32),
        w2=lin(ks[6], dff, d_model),
        b2=0.01 * jax.random.normal(ks[7], (d_model,), jnp.float32),
        ln1_a=jnp.ones((1,), jnp.float32), ln1_b=jnp.zeros((1,), jnp.float32),
        ln2_a=jnp.ones((1,), jnp.float32), ln2_b=jnp.zeros((1,), jnp.float32),
    )


def encoder_block_ref(x, src_mask, p):
    """Pure-JAX f32 reference with identical (eval-mode) semantics."""
    B, S, D = x.shape
    H = p["h"]
    dk = D // H

    def ln(t, a, b):
        mean = jnp.mean(t, axis=-1, keepdims=True)
        d = t - mean
        sd = jnp.sqrt(jnp.sum(d * d, axis=-1, keepdims=True) / (t.shape[-1] - 1))
        return d * a / (sd + EPS) + b

    xn = ln(x, p["ln1_a"], p["ln1_b"])
    q = xn @ p["wq"] + p["bq"]
    k = xn @ p["wk"] + p["bk"]
    v = xn @ p["wv"] + p["bv"]

    def heads(t):
        return t.reshape(B, S, H, dk).transpose(0, 2, 1, 3)

    qh, kh, vh = heads(q), heads(k), heads(v)
    scores = (qh @ kh.transpose(0, 1, 3, 2)) / math.sqrt(dk)
    scores = jnp.where(src_mask == 0, -1e9, scores)
    attn = jax.nn.softmax(scores, axis=-1)
    ctx = (attn @ vh).transpose(0, 2, 1, 3).reshape(B, S, D)
    y1 = x + (ctx @ p["wo"] + p["bo"])
    yn = ln(y1, p["ln2_a"], p["ln2_b"])
    ff = jnp.maximum(yn @ p["w1"] + p["b1"], 0.0) @ p["w2"] + p["b2"]
    return y1 + ff


if __name__ == "__main__":
    key = jax.random.PRNGKey(0)
    batch, seq, d_model, n_heads, dff = 2, 8, 32, 4, 64
    kx, kp = jax.random.split(key)
    x = jax.random.normal(kx, (batch, seq, d_model), dtype=jnp.float32)
    raw_params = init_params(kp, d_model, n_heads, dff)
    params = prepare_params(raw_params)

    # key-padding style src_mask (B, 1, S, S): batch b attends to the first
    # max(S - 2b, 1) keys (exercises the masked_fill path).
    lengths = jnp.maximum(seq - 2 * jnp.arange(batch), 1)
    key_mask = (jnp.arange(seq)[None, :] < lengths[:, None]).astype(jnp.float32)
    src_mask = jnp.broadcast_to(key_mask[:, None, None, :],
                                (batch, 1, seq, seq))

    out = encoder_block(x, src_mask, params)
    out = jax.block_until_ready(out)

    with jax.default_matmul_precision("highest"):
        ref = encoder_block_ref(x, src_mask, raw_params)

    assert out.shape == x.shape
    # Tolerance budgets for bf16 MXU matmuls (weights + activation casts) vs
    # the f32 reference; any structural bug (wrong mask/transpose/norm)
    # produces O(1) errors and still fails.
    assert jnp.allclose(out, ref, atol=6e-2, rtol=6e-2), (
        "mismatch vs reference, max abs err = %r"
        % float(jnp.max(jnp.abs(out - ref))))

    print("KERNEL_OK")
</pallas_src>

<mosaic_0001>
module attributes {stable_mosaic.version = 11 : i64} {
  func.func @_ln_qkv_kernel(%arg0: i32, %arg1: memref<1xf32, #tpu.memory_space<smem>>, %arg2: memref<1xf32, #tpu.memory_space<smem>>, %arg3: memref<16x32xf32, #tpu.memory_space<vmem>>, %arg4: memref<32x96xbf16, #tpu.memory_space<vmem>>, %arg5: memref<1x96xf32, #tpu.memory_space<vmem>>, %arg6: memref<16x96xbf16, #tpu.memory_space<vmem>>) attributes {dimension_semantics = [#tpu.dimension_semantics<parallel>], iteration_bounds = array<i64: 1>, scalar_prefetch = 0 : i64, scratch_operands = 0 : i64, tpu.core_type = #tpu.core_type<tc>, window_params = [{transform_indices = @transform_0, window_bounds = array<i64: 1>}, {transform_indices = @transform_1, window_bounds = array<i64: 1>}, {transform_indices = @transform_2, window_bounds = array<i64: 16, 32>}, {pipeline_mode = #tpu.pipeline_mode<synchronous>, transform_indices = @transform_3, window_bounds = array<i64: 32, 96>}, {pipeline_mode = #tpu.pipeline_mode<synchronous>, transform_indices = @transform_4, window_bounds = array<i64: 1, 96>}, {transform_indices = @transform_5, window_bounds = array<i64: 16, 96>}]} {
    %c0 = arith.constant 0 : index
    %c0_0 = arith.constant 0 : index
    %0 = vector.load %arg3[%c0, %c0_0] : memref<16x32xf32, #tpu.memory_space<vmem>>, vector<16x32xf32>
    %c0_1 = arith.constant 0 : index
    %1 = memref.load %arg1[%c0_1] : memref<1xf32, #tpu.memory_space<smem>>
    %c0_2 = arith.constant 0 : index
    %2 = memref.load %arg2[%c0_2] : memref<1xf32, #tpu.memory_space<smem>>
    %cst = arith.constant dense<0.000000e+00> : vector<16xf32>
    %3 = vector.multi_reduction <add>, %0, %cst [1] : vector<16x32xf32> to vector<16xf32>
    %4 = vector.shape_cast %3 : vector<16xf32> to vector<16x1xf32>
    %cst_3 = arith.constant 3.125000e-02 : f32
    %5 = vector.broadcast %cst_3 : f32 to vector<16x1xf32>
    %6 = arith.mulf %4, %5 : vector<16x1xf32>
    %7 = vector.broadcast %6 : vector<16x1xf32> to vector<16x32xf32>
    %8 = arith.subf %0, %7 : vector<16x32xf32>
    %9 = arith.mulf %8, %8 : vector<16x32xf32>
    %cst_4 = arith.constant dense<0.000000e+00> : vector<16xf32>
    %10 = vector.multi_reduction <add>, %9, %cst_4 [1] : vector<16x32xf32> to vector<16xf32>
    %11 = vector.shape_cast %10 : vector<16xf32> to vector<16x1xf32>
    %cst_5 = arith.constant 0.0322580636 : f32
    %12 = vector.broadcast %cst_5 : f32 to vector<16x1xf32>
    %13 = arith.mulf %11, %12 : vector<16x1xf32>
    %14 = math.sqrt %13 : vector<16x1xf32>
    %cst_6 = arith.constant 9.99999997E-7 : f32
    %15 = vector.broadcast %cst_6 : f32 to vector<16x1xf32>
    %16 = arith.addf %14, %15 : vector<16x1xf32>
    %17 = tpu.reciprocal %16 {approx = true} : vector<16x1xf32> -> vector<16x1xf32>
    %18 = vector.broadcast %1 : f32 to vector<16x1xf32>
    %19 = arith.mulf %18, %17 : vector<16x1xf32>
    %20 = vector.broadcast %19 : vector<16x1xf32> to vector<16x32xf32>
    %21 = arith.mulf %8, %20 : vector<16x32xf32>
    %22 = vector.broadcast %2 : f32 to vector<16x32xf32>
    %23 = arith.addf %21, %22 : vector<16x32xf32>
    %24 = arith.truncf %23 : vector<16x32xf32> to vector<16x32xbf16>
    %c0_7 = arith.constant 0 : index
    %c0_8 = arith.constant 0 : index
    %25 = vector.load %arg4[%c0_7, %c0_8] : memref<32x96xbf16, #tpu.memory_space<vmem>>, vector<32x96xbf16>
    %cst_9 = arith.constant dense<0.000000e+00> : vector<16x96xf32>
    %26 = tpu.matmul %24, %25, %cst_9 {dimension_numbers = #tpu.dot_dimension_numbers<[1], [0], [0], [1], [0, 0, 1, 1], [], []>} : vector<16x32xbf16>, vector<32x96xbf16>, vector<16x96xf32> -> vector<16x96xf32>
    %c0_10 = arith.constant 0 : index
    %c0_11 = arith.constant 0 : index
    %27 = vector.load %arg5[%c0_10, %c0_11] : memref<1x96xf32, #tpu.memory_space<vmem>>, vector<1x96xf32>
    %28 = vector.broadcast %27 : vector<1x96xf32> to vector<16x96xf32>
    %29 = arith.addf %26, %28 : vector<16x96xf32>
    %30 = arith.truncf %29 : vector<16x96xf32> to vector<16x96xbf16>
    %c0_12 = arith.constant 0 : index
    %c0_13 = arith.constant 0 : index
    %31 = vector.load %arg6[%c0_12, %c0_13] : memref<16x96xbf16, #tpu.memory_space<vmem>>, vector<16x96xbf16>
    tpu.vector_store %arg6[%c0_12, %c0_13], %30 {strides = array<i32>} : memref<16x96xbf16, #tpu.memory_space<vmem>>, vector<16x96xbf16>,
    return
  }
  func.func @transform_0(%arg0: i32) -> i32 {
    %c0_i32 = arith.constant 0 : i32
    %c0_i32_0 = arith.constant 0 : i32
    return %c0_i32 : i32
  }
  func.func @transform_1(%arg0: i32) -> i32 {
    %c0_i32 = arith.constant 0 : i32
    %c0_i32_0 = arith.constant 0 : i32
    return %c0_i32 : i32
  }
  func.func @transform_2(%arg0: i32) -> (i32, i32) {
    %c0_i32 = arith.constant 0 : i32
    %c0_i32_0 = arith.constant 0 : i32
    return %arg0, %c0_i32 : i32, i32
  }
  func.func @transform_3(%arg0: i32) -> (i32, i32) {
    %c0_i32 = arith.constant 0 : i32
    %c0_i32_0 = arith.constant 0 : i32
    %c0_i32_1 = arith.constant 0 : i32
    return %c0_i32, %c0_i32_0 : i32, i32
  }
  func.func @transform_4(%arg0: i32) -> (i32, i32) {
    %c0_i32 = arith.constant 0 : i32
    %c0_i32_0 = arith.constant 0 : i32
    %c0_i32_1 = arith.constant 0 : i32
    return %c0_i32, %c0_i32_0 : i32, i32
  }
  func.func @transform_5(%arg0: i32) -> (i32, i32) {
    %c0_i32 = arith.constant 0 : i32
    %c0_i32_0 = arith.constant 0 : i32
    return %arg0, %c0_i32 : i32, i32
  }
}

</mosaic_0001>

<llo_original>
// kernel: tpu_custom_call.1
$region0: #{tpu_custom_call.1}
  #allocation0 [shape = 'u32[]', space=smem, size = 0x4, offset = 0x4, fixed_abs, tag = 'smem constant byte address 0x4 - core index']
  #allocation1 [shape = 'u32[144,128]{1,0:T(1,128)}', space=vmem, size = 0x12000, scoped, tag = 'internal scratch']
  #allocation2 [shape = 'f32[1]{0:T(128)S(6)}', space=smem, size = 0x200, scoped, tag = 'scoped memory for tpu_custom_call.1']
  #allocation3 [shape = 'f32[1]{0:T(128)S(6)}', space=smem, size = 0x200, scoped, tag = 'scoped memory for tpu_custom_call.1']
  %s0 = inlined_call_operand.<no memory space> [shape: f32[1], index: 0, kind: input, shape index: {}]
  %s1 = inlined_call_operand.<no memory space> [shape: f32[1], index: 1, kind: input, shape index: {}]
  %s2 = inlined_call_operand.hbm [shape: f32[16,32], index: 2, kind: input, shape index: {}]
  %s3 = inlined_call_operand.hbm [shape: bf16[32,96], index: 3, kind: input, shape index: {}]
  %s4 = inlined_call_operand.vmem [shape: f32[1,96], index: 4, kind: input, shape index: {}]
  %s5 = inlined_call_operand.hbm [shape: bf16[16,96], index: 5, kind: output, shape index: {}]
  %s6 = sld [smem:[#allocation0]]
  $region38: #{tpu_custom_call.1} parent=0
    _
  %s8 = ssub.s32 1, %s6
  %s9 = scalar_select 0, %s8, %s6
  %10 = sst [smem:[#allocation2]] %s0
  %11 = sst [smem:[#allocation3]] %s1
  $region1: #{tpu_custom_call.1} parent=0
    #allocation4 [shape = 'u8[8192]{0}', space=vmem, size = 0x2000, scoped, tag = 'input window, operand 2, single buffered']
    #allocation5 [shape = 's32[1]{0}', space=sflag, size = 0x4, scoped, tag = 'scoped memory for tpu_custom_call.1']
    #allocation6 [shape = 's32[1]{0}', space=sflag, size = 0x4, scoped, tag = 'scoped memory for tpu_custom_call.1']
    #allocation7 [shape = 'u8[8192]{0}', space=vmem, size = 0x2000, scoped, tag = 'input window, operand 3, single buffered']
    #allocation8 [shape = 's32[1]{0}', space=sflag, size = 0x4, scoped, tag = 'scoped memory for tpu_custom_call.1']
    #allocation9 [shape = 'u8[4096]{0}', space=vmem, size = 0x1000, scoped, tag = 'output window, operand 0, single buffered']
    %12 = vsyncpa [#allocation5], 0
    %13 = vsyncpa [#allocation8], 0
    %14 = vsyncpa [#allocation6], 0
    // Predicated region
    $region2: #{tpu_custom_call.1} parent=1 // pred_check
      _
    $region3: #{tpu_custom_call.1} parent=1 // pred_check_branch
      %16 = sbr.rel (0) target = $region5
    $region4: #{tpu_custom_call.1} parent=1 // pred_region
      _
    $region5: #{tpu_custom_call.1} parent=1 // pred_fallthru
      _
    // Predicated region
    $region6: #{tpu_custom_call.1} parent=1 // pred_check
      _
    $region7: #{tpu_custom_call.1} parent=1 // pred_check_branch
      %18 = sbr.rel (0) target = $region9
    $region8: #{tpu_custom_call.1} parent=1 // pred_region
      _
    $region9: #{tpu_custom_call.1} parent=1 // pred_fallthru
      _
    // Predicated region
    $region10: #{tpu_custom_call.1} parent=1 // pred_check
      _
    $region11: #{tpu_custom_call.1} parent=1 // pred_check_branch
      %20 = sbr.rel (0) target = $region13
    $region12: #{tpu_custom_call.1} parent=1 // pred_region
      %s22 = ssub.s32 256, 256
      %23 = vsyncadd [#allocation5], %s22
      %s24 = sshll.u32 [#allocation4], 4
      %s25 = int_to_ptr.vmem [resolvable:$true] %s24
      %30 = dma.hbm_to_vmem [thread:$0]  %s2, 256, %s25, [#allocation5], 128, 128, 8
    $region13: #{tpu_custom_call.1} parent=1 // pred_fallthru
      _
    // Predicated region
    $region14: #{tpu_custom_call.1} parent=1 // pred_check
      _
    $region15: #{tpu_custom_call.1} parent=1 // pred_check_branch
      %32 = sbr.rel (0) target = $region17
    $region16: #{tpu_custom_call.1} parent=1 // pred_region
      %s34 = ssub.s32 256, 256
      %35 = vsyncadd [#allocation8], %s34
      %s36 = sshll.u32 [#allocation7], 4
      %s37 = int_to_ptr.vmem [resolvable:$true] %s36
      %42 = dma.hbm_to_vmem [thread:$0]  %s3, 256, %s37, [#allocation8], 64, 64, 4
    $region17: #{tpu_custom_call.1} parent=1 // pred_fallthru
      _
    // Predicated region
    $region18: #{tpu_custom_call.1} parent=1 // pred_check
      _
    $region19: #{tpu_custom_call.1} parent=1 // pred_check_branch
      %44 = sbr.rel (0) target = $region21
    $region20: #{tpu_custom_call.1} parent=1 // pred_region
      _
    $region21: #{tpu_custom_call.1} parent=1 // pred_fallthru
      _
    // Predicated region
    $region22: #{tpu_custom_call.1} parent=1 // pred_check
      _
    $region23: #{tpu_custom_call.1} parent=1 // pred_check_branch
      %46 = sbr.rel (0) target = $region25
    $region24: #{tpu_custom_call.1} parent=1 // pred_region
      %47 = dma.done [#allocation5], 256
    $region25: #{tpu_custom_call.1} parent=1 // pred_fallthru
      _
    // Predicated region
    $region26: #{tpu_custom_call.1} parent=1 // pred_check
      _
    $region27: #{tpu_custom_call.1} parent=1 // pred_check_branch
      %49 = sbr.rel (0) target = $region29
    $region28: #{tpu_custom_call.1} parent=1 // pred_region
      %50 = dma.done [#allocation8], 256
    $region29: #{tpu_custom_call.1} parent=1 // pred_fallthru
      _
    %v52 = vld [vmem:[#allocation4] sm:$0xff]
    %v53 = vld [vmem:[#allocation4 + $0x8] sm:$0xff]
    %s54 = sld [smem:[#allocation2]]
    %s55 = sld [smem:[#allocation3]]
    %vm56 = vcmask 261120
    %v57 = vsel %vm56, %v52, 0.0
    %58 = vadd.xlane.f32.xlu0 %v57
    %v59 = vpop.xlane.xlu0 %58
    %v60 = vsel %vm56, %v53, 0.0
    %61 = vadd.xlane.f32.xlu0 %v60
    %v62 = vpop.xlane.xlu0 %61
    %v63 = vmul.f32 %v59, 0.03125
    %v64 = vmul.f32 %v62, 0.03125
    %v65 = vsub.f32 %v52, %v63
    %v66 = vsub.f32 %v53, %v64
    %v67 = vmul.f32 %v65, %v65
    %v68 = vmul.f32 %v66, %v66
    %v69 = vsel %vm56, %v67, 0.0
    %70 = vadd.xlane.f32.xlu0 %v69
    %v71 = vpop.xlane.xlu0 %70
    %v72 = vsel %vm56, %v68, 0.0
    %73 = vadd.xlane.f32.xlu0 %v72
    %v74 = vpop.xlane.xlu0 %73
    %v75 = vmul.f32 %v71, 0.032258064
    %v76 = vmul.f32 %v74, 0.032258064
    %v77 = vrsqrt.pop %v75
    %v78 = vmul.f32 %v75, %v77
    %vm79 = vcmp.eq.f32.partialorder %v75, inf
    %v80 = vsel %vm79, %v75, %v78
    %vm81 = vcmp.eq.f32.partialorder %v75, 0.0
    %v82 = vand.u32 %v75, 2147483648
    %v83 = vsel %vm81, %v82, %v80
    %v84 = vrsqrt.pop %v76
    %v85 = vmul.f32 %v76, %v84
    %vm86 = vcmp.eq.f32.partialorder %v76, inf
    %v87 = vsel %vm86, %v76, %v85
    %vm88 = vcmp.eq.f32.partialorder %v76, 0.0
    %v89 = vand.u32 %v76, 2147483648
    %v90 = vsel %vm88, %v89, %v87
    %v91 = vadd.f32 %v83, 1e-06
    %v92 = vadd.f32 %v90, 1e-06
    %v93 = vrcp.pop %v91
    %v94 = vrcp.pop %v92
    %v95 = vstv %s54
    %v96 = vmul.f32 %v95, %v93
    %v97 = vmul.f32 %v95, %v94
    %v98 = vmul.f32 %v65, %v96
    %v99 = vmul.f32 %v66, %v97
    %v100 = vstv %s55
    %v101 = vadd.f32 %v98, %v100
    %v102 = vadd.f32 %v99, %v100
    %v103 = vpack.c.bf16 %v102, %v101
    %v104 = vld [vmem:[#allocation7] sm:$0xf]
    %v105 = vld [vmem:[#allocation7 + $0x4] sm:$0xf]
    %v106 = vld [vmem:[#allocation7 + $0x8] sm:$0xf]
    %v107 = vld [vmem:[#allocation7 + $0xc] sm:$0xf]
    %v108 = vld [vmem:[%s4] sm:$0x1]
    %v110 = vlaneseq
    %v111 = vshrl.u32 %v110, 7
    %v112 = vsub.s32 0, %v111
    %v113 = vrot.slane %v108, %v112
    %v119 = vunpack.c.l.b16 %v104
    %v120 = vunpack.c.l.b16 %v105
    %v121 = vunpack.c.l.b16 %v106
    %v122 = vunpack.c.l.b16 %v107
    %v123 = vpack.c.b16 %v120, %v119
    %v124 = vpack.c.b16 %v122, %v121
    %v128 = vsel %vm56, %v103, 0
    %130 = vmatprep.subr.bf16.mxu0 0
    %131 = vmatpush1.bf16.msra.mxu0 %v123
    %132 = vmatprep.subr.bf16.mxu0 0
    %133 = vmatpush1.bf16.msra.mxu0 %v124
    %134 = vmatprep.subr.bf16.mxu0 0
    %135 = vmatpush1.bf16.msra.mxu0 0
    %136 = vmatprep.subr.bf16.mxu0 0
    %137 = vmatpush1.bf16.msra.mxu0 0
    %138 = vmatprep.subr.bf16.mxu0 0
    %139 = vmatpush1.bf16.msra.mxu0 0
    %140 = vmatprep.subr.bf16.mxu0 0
    %141 = vmatpush1.bf16.msra.mxu0 0
    %142 = vmatprep.subr.bf16.mxu0 0
    %143 = vmatpush1.bf16.msra.mxu0 0
    %144 = vmatprep.subr.bf16.mxu0 0
    %145 = vmatpush1.bf16.msra.mxu0 0
    %146 = vmatprep.subr.bf16.mxu0 0
    %147 = vmatpush1.bf16.msra.mxu0 0
    %148 = vmatprep.subr.bf16.mxu0 0
    %149 = vmatpush1.bf16.msra.mxu0 0
    %150 = vmatprep.subr.bf16.mxu0 0
    %151 = vmatpush1.bf16.msra.mxu0 0
    %152 = vmatprep.subr.bf16.mxu0 0
    %153 = vmatpush1.bf16.msra.mxu0 0
    %154 = vmatprep.subr.bf16.mxu0 0
    %155 = vmatpush1.bf16.msra.mxu0 0
    %156 = vmatprep.subr.bf16.mxu0 0
    %157 = vmatpush1.bf16.msra.mxu0 0
    %158 = vmatprep.subr.bf16.mxu0 0
    %159 = vmatpush1.bf16.msra.mxu0 0
    %160 = vmatprep.subr.bf16.mxu0 0
    %161 = vmatpush1.bf16.msra.mxu0 0
    %162 = vmatprep.mubr.bf16.mxu0 0
    %163 = vmatmul.mubr.bf16.gmra.mrb[0].mxu0 %v128
    %v164 = vpop.f32.mrb[0].mxu0
    %v165 = vadd.f32 %v113, %v164
    %v166 = vpop.f32.mrb[0].mxu0
    %v167 = vpop.f32.mrb[0].mxu0
    %v168 = vadd.f32 %v113, %v167
    %v169 = vpop.f32.mrb[0].mxu0
    %170 = vdwg.mxu0
    %v171 = vpack.c.bf16 %v168, %v165
    %v173 = vunpack.c.l.b16 %v171
    %v174 = vunpack.c.h.b16 %v171
    %v175 = vpack.c.b16 %v173, %v173
    %v176 = vpack.c.b16 %v174, %v174
    %vm179 = vcmask 781312
    %180 = vst.msk [vmem:[#allocation9] sm:$0xf] %vm179, %v175
    %181 = vst.msk [vmem:[#allocation9 + $0x4] sm:$0xf] %vm179, %v176
    // Predicated region
    $region30: #{tpu_custom_call.1} parent=1 // pred_check
      _
    $region31: #{tpu_custom_call.1} parent=1 // pred_check_branch
      %183 = sbr.rel (0) target = $region33
    $region32: #{tpu_custom_call.1} parent=1 // pred_region
      %s185 = ssub.s32 128, 128
      %186 = vsyncadd [#allocation6], %s185
      %s187 = sshll.u32 [#allocation9], 4
      %s188 = int_to_ptr.vmem [resolvable:$true] %s187
      %193 = dma.vmem_to_hbm [thread:$0]  %s188, 128, %s5, [#allocation6], 64, 64, 4
    $region33: #{tpu_custom_call.1} parent=1 // pred_fallthru
      _
    // Predicated region
    $region34: #{tpu_custom_call.1} parent=1 // pred_check
      _
    $region35: #{tpu_custom_call.1} parent=1 // pred_check_branch
      %195 = sbr.rel (0) target = $region37
    $region36: #{tpu_custom_call.1} parent=1 // pred_region
      %196 = dma.done [#allocation6], 128
    $region37: #{tpu_custom_call.1} parent=1 // pred_fallthru
      _
    %197 = vsyncpa [#allocation5], 1
    %198 = vsyncpa [#allocation8], 1
    %199 = vsyncpa [#allocation6], 1

</llo_original>
